<compile_context>
chip_gen: v5e
topology: v5e:2x2
jax: 0.10.0
libtpu: 0.0.40
codegen_flags: <defaults>
</compile_context>

<pallas_src>
import functools

import jax
import jax.numpy as jnp
from jax.experimental import pallas as pl
from jax.experimental.pallas import tpu as pltpu


LANE = 128
_TARGET_BLOCK_BYTES = 4 * 1024 * 1024   # ~4 MiB per block (perf-review target)
_MIN_GRID = 4                           # keep >= 4 grid steps when possible so
                                        # v7x's 2 TensorCores both get work
_VMEM_LIMIT_BYTES = 32 * 1024 * 1024    # lifts v5e's 16 MiB scoped default;
                                        # well under v7x's 64 MiB physical VMEM


def _learned_softplus_kernel(scal_ref, x_ref, o_ref, *, threshold: float):
    # scal_ref is a (2,) f32 SMEM array: [beta, 1/beta].
    beta = scal_ref[0]
    inv_beta = scal_ref[1]

    x = x_ref[...].astype(jnp.float32)
    beta_x = beta * x
    # NOTE: exp(beta_x) overflows to +inf for beta_x >~ 88, but only in the
    # branch that `where` discards (beta_x >= threshold); log1p(inf) = inf and
    # no inf*0 pattern exists, so no NaN can be produced.  Keep it this way if
    # rewriting "stably" later.
    soft = jnp.log1p(jnp.exp(beta_x)) * inv_beta   # reciprocal mul, no divide
    o_ref[...] = jnp.where(beta_x < threshold, soft, x).astype(o_ref.dtype)


def _choose_row_tile(rows: int, sublane: int, row_tile: int) -> int:
    """Block row count: byte-targeted (large), sublane-aligned, but never so
    large that the 1-D grid collapses below _MIN_GRID steps for tensors big
    enough to split (grid=1 would serialize onto one of v7x's two TCs)."""
    if rows <= sublane:
        return rows                                   # single block == full array
    split_tile = max((pl.cdiv(rows, _MIN_GRID) // sublane) * sublane, sublane)
    return min(row_tile, split_tile, rows)


def learned_softplus(x: jax.Array, beta, threshold: float = 20.0,
                     block_bytes: int = _TARGET_BLOCK_BYTES) -> jax.Array:
    """Applies LearnedSoftPlusWithoutTemp elementwise to x (any shape)."""
    orig_shape = x.shape
    dtype = x.dtype
    itemsize = jnp.dtype(dtype).itemsize
    # dtype-aware sublane packing: f32 -> 8, bf16/f16 -> 16, int8/fp8 -> 32.
    sublane = max(8, 32 // itemsize)

    flat = x.reshape(-1)
    n = flat.shape[0]
    if n == 0:
        return x

    # Pad only to a multiple of LANE (<=127 elements) when misaligned; rows
    # need NOT be a multiple of `sublane` because a ragged last grid block is
    # masked by Pallas.  Aligned inputs (the common case) are zero-copy.
    # TODO(synk): handle the sub-128 tail in-kernel (SMEM length + masked
    # pltpu.store) so misaligned sizes also avoid the pad/slice HBM passes.
    padded_n = pl.cdiv(n, LANE) * LANE
    if padded_n != n:
        flat = jnp.pad(flat, (0, padded_n - n))
    rows = padded_n // LANE
    x2d = flat.reshape(rows, LANE)

    # Byte-targeted row tile (4 MiB -> 8192 rows f32 / 16384 bf16 / 32768 i8),
    # clamped so the grid keeps >= _MIN_GRID steps when the tensor allows it.
    row_tile = max((block_bytes // (LANE * itemsize)) // sublane, 1) * sublane
    tile = _choose_row_tile(rows, sublane, row_tile)
    grid = (pl.cdiv(rows, tile),)

    beta_f32 = jnp.asarray(beta, dtype=jnp.float32).reshape(())
    scalars = jnp.stack([beta_f32, 1.0 / beta_f32])   # (2,) f32 -> SMEM

    kernel = functools.partial(_learned_softplus_kernel,
                               threshold=float(threshold))

    cost = pl.CostEstimate(
        flops=5 * padded_n,
        transcendentals=2 * padded_n,              # exp + log1p per element
        bytes_accessed=2 * padded_n * itemsize,    # read x + write out
    )

    out2d = pl.pallas_call(
        kernel,
        out_shape=jax.ShapeDtypeStruct((rows, LANE), dtype),
        grid=grid,
        in_specs=[
            pl.BlockSpec(memory_space=pltpu.SMEM),          # [beta, 1/beta]
            pl.BlockSpec((tile, LANE), lambda i: (i, 0)),   # x tile
        ],
        out_specs=pl.BlockSpec((tile, LANE), lambda i: (i, 0)),
        compiler_params=pltpu.CompilerParams(
            dimension_semantics=("parallel",),
            vmem_limit_bytes=_VMEM_LIMIT_BYTES,
        ),
        cost_estimate=cost,
    )(scalars, x2d)

    out_flat = out2d.reshape(-1)
    if padded_n != n:
        out_flat = out_flat[:n]
    return out_flat.reshape(orig_shape)


def learned_softplus_ref(x, beta, threshold=20.0):
    beta_x = beta * x
    return jnp.where(beta_x < threshold, jnp.log1p(jnp.exp(beta_x)) / beta, x)


if __name__ == "__main__":
    key = jax.random.PRNGKey(0)
    k0, k1, k2 = jax.random.split(key, 3)

    # Deterministic runtime scalar beta (exercises both branches of the where,
    # since beta*x spans well past threshold=20).
    beta = jnp.asarray(1.5, dtype=jnp.float32)
    threshold = 20.0

    # Main small NCHW-like input (lane-aligned, zero-copy path, 2-step grid).
    x = jax.random.normal(k0, (2, 4, 16, 16), dtype=jnp.float32) * 10.0
    out = jax.block_until_ready(learned_softplus(x, beta, threshold))
    ref = learned_softplus_ref(x, beta, threshold)
    assert out.shape == x.shape and out.dtype == x.dtype
    assert jnp.allclose(out, ref, atol=1e-5, rtol=1e-5), "mismatch vs reference"

    # Ragged-last-grid-block path (rows=20, tile=8 -> 3 steps, last masked).
    x_rag = jax.random.normal(k1, (2, 10, 128), dtype=jnp.float32) * 10.0
    out_rag = jax.block_until_ready(learned_softplus(x_rag, beta, threshold))
    assert jnp.allclose(out_rag, learned_softplus_ref(x_rag, beta, threshold),
                        atol=1e-5, rtol=1e-5), "ragged-block mismatch"

    # Misaligned (non-multiple-of-128) path: minimal lane pad + final slice.
    x_odd = jax.random.normal(k2, (3, 5, 7), dtype=jnp.float32) * 10.0
    out_odd = jax.block_until_ready(learned_softplus(x_odd, beta, threshold))
    assert out_odd.shape == x_odd.shape
    assert jnp.allclose(out_odd, learned_softplus_ref(x_odd, beta, threshold),
                        atol=1e-5, rtol=1e-5), "misaligned-tail mismatch"

    print("KERNEL_OK")
</pallas_src>

<mosaic_0001>
module attributes {stable_mosaic.version = 11 : i64} {
  func.func @_learned_softplus_kernel(%arg0: i32, %arg1: memref<2xf32, #tpu.memory_space<smem>>, %arg2: memref<8x128xf32, #tpu.memory_space<vmem>>, %arg3: memref<8x128xf32, #tpu.memory_space<vmem>>) attributes {dimension_semantics = [#tpu.dimension_semantics<parallel>], iteration_bounds = array<i64: 2>, scalar_prefetch = 0 : i64, scratch_operands = 0 : i64, tpu.core_type = #tpu.core_type<tc>, window_params = [{transform_indices = @transform_0, window_bounds = array<i64: 2>}, {transform_indices = @transform_1, window_bounds = array<i64: 8, 128>}, {transform_indices = @transform_2, window_bounds = array<i64: 8, 128>}]} {
    %c0 = arith.constant 0 : index
    %0 = memref.load %arg1[%c0] : memref<2xf32, #tpu.memory_space<smem>>
    %c1 = arith.constant 1 : index
    %1 = memref.load %arg1[%c1] : memref<2xf32, #tpu.memory_space<smem>>
    %c0_0 = arith.constant 0 : index
    %c0_1 = arith.constant 0 : index
    %2 = vector.load %arg2[%c0_0, %c0_1] : memref<8x128xf32, #tpu.memory_space<vmem>>, vector<8x128xf32>
    %3 = vector.broadcast %0 : f32 to vector<8x128xf32>
    %4 = arith.mulf %3, %2 : vector<8x128xf32>
    %5 = math.exp %4 : vector<8x128xf32>
    %6 = math.log1p %5 : vector<8x128xf32>
    %7 = vector.broadcast %1 : f32 to vector<8x128xf32>
    %8 = arith.mulf %6, %7 : vector<8x128xf32>
    %cst = arith.constant 2.000000e+01 : f32
    %9 = vector.broadcast %cst : f32 to vector<8x128xf32>
    %10 = arith.cmpf olt, %4, %9 : vector<8x128xf32>
    %11 = arith.select %10, %8, %2 : vector<8x128xi1>, vector<8x128xf32>
    %c0_2 = arith.constant 0 : index
    %c0_3 = arith.constant 0 : index
    %12 = vector.load %arg3[%c0_2, %c0_3] : memref<8x128xf32, #tpu.memory_space<vmem>>, vector<8x128xf32>
    tpu.vector_store %arg3[%c0_2, %c0_3], %11 {strides = array<i32>} : memref<8x128xf32, #tpu.memory_space<vmem>>, vector<8x128xf32>,
    return
  }
  func.func @transform_0(%arg0: i32) -> i32 {
    %c0_i32 = arith.constant 0 : i32
    %c0_i32_0 = arith.constant 0 : i32
    return %c0_i32 : i32
  }
  func.func @transform_1(%arg0: i32) -> (i32, i32) {
    %c0_i32 = arith.constant 0 : i32
    %c0_i32_0 = arith.constant 0 : i32
    return %arg0, %c0_i32 : i32, i32
  }
  func.func @transform_2(%arg0: i32) -> (i32, i32) {
    %c0_i32 = arith.constant 0 : i32
    %c0_i32_0 = arith.constant 0 : i32
    return %arg0, %c0_i32 : i32, i32
  }
}

</mosaic_0001>

<llo_original>
// kernel: tpu_custom_call.1
$region0: #{tpu_custom_call.1}
  #allocation0 [shape = 'u32[]', space=smem, size = 0x4, offset = 0x4, fixed_abs, tag = 'smem constant byte address 0x4 - core index']
  #allocation1 [shape = 'u32[72,128]{1,0:T(1,128)}', space=vmem, size = 0x9000, scoped, tag = 'internal scratch']
  %s0 = inlined_call_operand.hbm [shape: f32[2], index: 0, kind: input, shape index: {}]
  %s1 = inlined_call_operand.hbm [shape: f32[16,128], index: 1, kind: input, shape index: {}]
  %s2 = inlined_call_operand.hbm [shape: f32[16,128], index: 2, kind: output, shape index: {}]
  %s3 = sld [smem:[#allocation0]]
  $region49: #{tpu_custom_call.1} parent=0
    _
  %s5 = ssub.s32 1, %s3
  %s6 = scalar_select 0, %s5, %s3
  $region1: #{tpu_custom_call.1} parent=0
    #allocation2 [shape = 'u8[512]{0}', space=smem, size = 0x200, scoped, tag = 'input window, operand 0, single buffered']
    #allocation3 [shape = 's32[2]{0}', space=sflag, size = 0x8, scoped, tag = 'scoped memory for tpu_custom_call.1']
    #allocation4 [shape = 's32[2]{0}', space=sflag, size = 0x8, scoped, tag = 'scoped memory for tpu_custom_call.1']
    #allocation5 [shape = 's32[2]{0}', space=sflag, size = 0x8, scoped, tag = 'scoped memory for tpu_custom_call.1']
    #allocation6 [shape = 'u8[8192]{0}', space=vmem, size = 0x2000, scoped, tag = 'input window, operand 1']
    #allocation7 [shape = 'u8[8192]{0}', space=vmem, size = 0x2000, scoped, tag = 'output window, operand 0']
    %7 = vsyncpa [#allocation5], 0
    %8 = vsyncpa [#allocation3], 0
    %s9 = scalar_lea.sflag [#allocation3], 1
    %10 = vsyncpa %s9, 0
    %11 = vsyncpa [#allocation4], 0
    %s12 = scalar_lea.sflag [#allocation4], 1
    %13 = vsyncpa %s12, 0
    loop: start=0, step=1, limit=4
    $region2: #{tpu_custom_call.1} parent=1 // loop_pre_header
      _
    $region3: #{tpu_custom_call.1} parent=1 // loop_header
      %s15 = sphi 0, %s19
      %p16 = scmp.ge.s32.totalorder %s15, 4
      %s23 = sphi 0, %s23
      %s25 = sphi 0, %s23
      %s26 = sphi 0, %s25
      %s40 = sphi 0, %s26
      %s46 = sphi 0, %s48
      %s49 = sphi 0, %s46
      %s50 = sphi 0, %s49
      %s66 = sphi 0, %s50
      %s72 = sphi 0, %s74
      %s75 = sphi 0, %s72
      %s76 = sphi 0, %s75
      %s92 = sphi 0, %s76
    $region4: #{tpu_custom_call.1} parent=1 // loop_header_branch
      %18 = sbr.rel (%p16) target = $region8
    $region5: #{tpu_custom_call.1} parent=1 // loop_body
      %s20 = ssub.s32 %s15, 1
      %s21 = ssub.s32 %s15, 2
      %s22 = sadd.s32 %s15, 1
      %s24 = sadd.s32 %s23, 1
      %p27 = scmp.eq.s32.totalorder %s15, 1
      %p28 = scmp.ne.s32.totalorder %s23, %s25
      %p29 = scmp.eq.s32.totalorder %s15, 0
      %p30 = por %p28, %p29
      %p31 = scmp.ne.s32.totalorder %s23, %s25
      %p32 = scmp.eq.s32.totalorder %s20, 1
      %p33 = por %p31, %p32
      %p34 = scmp.ne.s32.totalorder %s25, %s26
      %p35 = scmp.eq.s32.totalorder %s20, 0
      %p36 = por %p34, %p35
      %p37 = scmp.ne.s32.totalorder %s25, %s26
      %p38 = scmp.eq.s32.totalorder %s21, 1
      %p39 = por %p37, %p38
      %p41 = scmp.ne.s32.totalorder %s26, %s40
      %p42 = scmp.eq.s32.totalorder %s21, 0
      %p43 = por %p41, %p42
      %s44 = ssub.s32 %s15, %s22
      %p45 = scmp.eq.s32.totalorder %s44, 0
      %s47 = sadd.s32 %s46, 1
      %s48 = scalar_select %p45, %s46, %s47
      %p51 = pneg %p45
      %p52 = scmp.eq.s32.totalorder %s15, 1
      %p53 = por %p51, %p52
      %p54 = scmp.ne.s32.totalorder %s46, %s49
      %p55 = scmp.eq.s32.totalorder %s15, 0
      %p56 = por %p54, %p55
      %p57 = scmp.ne.s32.totalorder %s46, %s49
      %p58 = scmp.eq.s32.totalorder %s20, 1
      %p59 = por %p57, %p58
      %p60 = scmp.ne.s32.totalorder %s49, %s50
      %p61 = scmp.eq.s32.totalorder %s20, 0
      %p62 = por %p60, %p61
      %p63 = scmp.ne.s32.totalorder %s49, %s50
      %p64 = scmp.eq.s32.totalorder %s21, 1
      %p65 = por %p63, %p64
      %p67 = scmp.ne.s32.totalorder %s50, %s66
      %p68 = scmp.eq.s32.totalorder %s21, 0
      %p69 = por %p67, %p68
      %s70 = ssub.s32 %s15, %s22
      %p71 = scmp.eq.s32.totalorder %s70, 0
      %s73 = sadd.s32 %s72, 1
      %s74 = scalar_select %p71, %s72, %s73
      %p77 = pneg %p71
      %p78 = scmp.eq.s32.totalorder %s15, 1
      %p79 = por %p77, %p78
      %p80 = scmp.ne.s32.totalorder %s72, %s75
      %p81 = scmp.eq.s32.totalorder %s15, 0
      %p82 = por %p80, %p81
      %p83 = scmp.ne.s32.totalorder %s72, %s75
      %p84 = scmp.eq.s32.totalorder %s20, 1
      %p85 = por %p83, %p84
      %p86 = scmp.ne.s32.totalorder %s75, %s76
      %p87 = scmp.eq.s32.totalorder %s20, 0
      %p88 = por %p86, %p87
      %p89 = scmp.ne.s32.totalorder %s75, %s76
      %p90 = scmp.eq.s32.totalorder %s21, 1
      %p91 = por %p89, %p90
      %p93 = scmp.ne.s32.totalorder %s76, %s92
      %p94 = scmp.eq.s32.totalorder %s21, 0
      %p95 = por %p93, %p94
      %p96 = scmp.le.s32.totalorder 1, %s15
      %p97 = scmp.lt.s32.totalorder %s15, 3
      %p98 = pnand %p96, %p97
      %p99 = pneg %p98
      // Predicated region
      $region9: #{tpu_custom_call.1} parent=5 // pred_check
        _
      $region10: #{tpu_custom_call.1} parent=5 // pred_check_branch
        %101 = sbr.rel (%p98) target = $region12
      $region11: #{tpu_custom_call.1} parent=5 // pred_region
        %s102 = ssub.s32 %s15, 1
        // Predicated region
        $region13: #{tpu_custom_call.1} parent=11 // pred_check
          %p103 = pneg %p36
        $region14: #{tpu_custom_call.1} parent=11 // pred_check_branch
          %105 = sbr.rel (%p103) target = $region16
        $region15: #{tpu_custom_call.1} parent=11 // pred_region
          %107 = vsyncadd [#allocation5], 0
          %s109 = sshll.u32 %s0, 4
          %s110 = int_to_ptr.hbm [resolvable:$true] %s109
          %112 = dma.hbm_to_smem %s110, 16, [#allocation2], [#allocation5]
        $region16: #{tpu_custom_call.1} parent=11 // pred_fallthru
          _
      $region12: #{tpu_custom_call.1} parent=5 // pred_fallthru
        _
      %p113 = scmp.lt.s32.totalorder %s15, 2
      // Predicated region
      $region17: #{tpu_custom_call.1} parent=5 // pred_check
        %p114 = pneg %p113
      $region18: #{tpu_custom_call.1} parent=5 // pred_check_branch
        %116 = sbr.rel (%p114) target = $region20
      $region19: #{tpu_custom_call.1} parent=5 // pred_region
        // Predicated region
        $region21: #{tpu_custom_call.1} parent=19 // pred_check
          %p117 = pneg %p56
        $region22: #{tpu_custom_call.1} parent=19 // pred_check_branch
          %119 = sbr.rel (%p117) target = $region24
        $region23: #{tpu_custom_call.1} parent=19 // pred_region
          %s120 = sand.u32 %s46, 1
          %s121 = scalar_lea.sflag [#allocation3], %s120
          %s122 = sand.u32 %s46, 1
          %s123 = smul.addr %s122, 8
          %s124 = scalar_lea.vmem [#allocation6], %s123
          %126 = vsyncadd %s121, 0
          %s127 = smul.addr %s15, 8
          %s128 = scalar_lea.hbm %s1, %s127
          %s130 = sshll.u32 %s128, 4
          %s131 = int_to_ptr.hbm [resolvable:$true] %s130
          %s132 = sshll.u32 %s124, 4
          %s133 = int_to_ptr.vmem [resolvable:$true] %s132
          %135 = dma.hbm_to_vmem [thread:$0]  %s131, 128, %s133, %s121
        $region24: #{tpu_custom_call.1} parent=19 // pred_fallthru
          _
      $region20: #{tpu_custom_call.1} parent=5 // pred_fallthru
        _
      %p136 = scmp.le.s32.totalorder 1, %s15
      %p137 = scmp.lt.s32.totalorder %s15, 3
      %p138 = pnand %p136, %p137
      %p139 = pneg %p138
      // Predicated region
      $region25: #{tpu_custom_call.1} parent=5 // pred_check
        _
      $region26: #{tpu_custom_call.1} parent=5 // pred_check_branch
        %141 = sbr.rel (%p138) target = $region28
      $region27: #{tpu_custom_call.1} parent=5 // pred_region
        %s142 = ssub.s32 %s15, 1
        // Predicated region
        $region29: #{tpu_custom_call.1} parent=27 // pred_check
          %p143 = pneg %p36
        $region30: #{tpu_custom_call.1} parent=27 // pred_check_branch
          %145 = sbr.rel (%p143) target = $region32
        $region31: #{tpu_custom_call.1} parent=27 // pred_region
          %147 = dma.done [#allocation5], 16
        $region32: #{tpu_custom_call.1} parent=27 // pred_fallthru
          _
        %s148 = sand.u32 %s49, 1
        %s149 = scalar_lea.sflag [#allocation3], %s148
        %s150 = sand.u32 %s49, 1
        %s151 = smul.addr %s150, 8
        %s152 = scalar_lea.vmem [#allocation6], %s151
        // Predicated region
        $region33: #{tpu_custom_call.1} parent=27 // pred_check
          %p153 = pneg %p62
        $region34: #{tpu_custom_call.1} parent=27 // pred_check_branch
          %155 = sbr.rel (%p153) target = $region36
        $region35: #{tpu_custom_call.1} parent=27 // pred_region
          %157 = dma.done %s149, 128
        $region36: #{tpu_custom_call.1} parent=27 // pred_fallthru
          _
        %158 = sfence
        %p159 = pneg %p36
        %p160 = pneg %p33
        %s161 = sand.u32 %s49, 1
        %s162 = scalar_lea.sflag [#allocation3], %s161
        %s163 = sand.u32 %s49, 1
        %s164 = smul.addr %s163, 8
        %s165 = scalar_lea.vmem [#allocation6], %s164
        %p166 = pneg %p62
        %p167 = pneg %p59
        %p168 = pneg %p88
        %p169 = pneg %p85
        %s170 = sand.u32 %s75, 1
        %s171 = scalar_lea.sflag [#allocation4], %s170
        %s172 = sand.u32 %s75, 1
        %s173 = smul.addr %s172, 8
        %s174 = scalar_lea.vmem [#allocation7], %s173
        %s175 = sld [smem:[#allocation2]]
        %s176 = sld [smem:[#allocation2 + $0x1]]
        %v177 = vld [vmem:[%s152] sm:$0xff]
        %v178 = vstv %s175
        %v179 = vmul.f32 %v178, %v177
        %v180 = vmul.f32 %v179, 1.442695
        %v181 = vpow.pop %v180
        %v182 = vadd.f32 %v181, 1.0
        %v183 = vlog2.pop %v182
        %v184 = vmul.f32 %v183, 0.6931472
        %v185 = vmul.f32 -0.5, %v181
        %v186 = vadd.f32 %v185, 1.0
        %v187 = vmul.f32 %v186, %v181
        %v188 = vand.u32 2147483647, %v181
        %vm189 = vcmp.lt.f32.partialorder %v188, 0.0004427343
        %v190 = vsel %vm189, %v187, %v184
        %v191 = vstv %s176
        %v192 = vmul.f32 %v190, %v191
        %vm193 = vcmp.lt.f32.partialorder %v179, 20.0
        %v194 = vsel %vm193, %v192, %v177
        %195 = vst [vmem:[%s174] sm:$0xff] %v194
        %s196 = sand.u32 %s75, 1
        %s197 = scalar_lea.sflag [#allocation4], %s196
        %s198 = sand.u32 %s75, 1
        %s199 = smul.addr %s198, 8
        %s200 = scalar_lea.vmem [#allocation7], %s199
        // Predicated region
        $region37: #{tpu_custom_call.1} parent=27 // pred_check
          %p201 = pneg %p85
        $region38: #{tpu_custom_call.1} parent=27 // pred_check_branch
          %203 = sbr.rel (%p201) target = $region40
        $region39: #{tpu_custom_call.1} parent=27 // pred_region
          %205 = vsyncadd %s197, 0
          %s206 = smul.addr %s20, 8
          %s207 = scalar_lea.hbm %s2, %s206
          %s209 = sshll.u32 %s200, 4
          %s210 = int_to_ptr.vmem [resolvable:$true] %s209
          %s211 = sshll.u32 %s207, 4
          %s212 = int_to_ptr.hbm [resolvable:$true] %s211
          %214 = dma.vmem_to_hbm [thread:$0]  %s210, 128, %s212, %s197
        $region40: #{tpu_custom_call.1} parent=27 // pred_fallthru
          _
      $region28: #{tpu_custom_call.1} parent=5 // pred_fallthru
        _
      %p215 = scmp.le.s32.totalorder 2, %s15
      // Predicated region
      $region41: #{tpu_custom_call.1} parent=5 // pred_check
        %p216 = pneg %p215
      $region42: #{tpu_custom_call.1} parent=5 // pred_check_branch
        %218 = sbr.rel (%p216) target = $region44
      $region43: #{tpu_custom_call.1} parent=5 // pred_region
        %s219 = ssub.s32 %s15, 2
        // Predicated region
        $region45: #{tpu_custom_call.1} parent=43 // pred_check
          %p220 = pneg %p91
        $region46: #{tpu_custom_call.1} parent=43 // pred_check_branch
          %222 = sbr.rel (%p220) target = $region48
        $region47: #{tpu_custom_call.1} parent=43 // pred_region
          %s223 = sand.u32 %s76, 1
          %s224 = scalar_lea.sflag [#allocation4], %s223
          %s225 = sand.u32 %s76, 1
          %s226 = smul.addr %s225, 8
          %s227 = scalar_lea.vmem [#allocation7], %s226
          %229 = dma.done %s224, 128
        $region48: #{tpu_custom_call.1} parent=43 // pred_fallthru
          _
      $region44: #{tpu_custom_call.1} parent=5 // pred_fallthru
        _
    $region6: #{tpu_custom_call.1} parent=1 // loop_footer
      %s19 = sadd.s32 1, %s15
    $region7: #{tpu_custom_call.1} parent=1 // loop_footer_branch
      %14 = sbr.rel target = $region3
    $region8: #{tpu_custom_call.1} parent=1 // loop_exit
      _
    %230 = vsyncpa [#allocation3], 1
    %s231 = scalar_lea.sflag [#allocation3], 1
    %232 = vsyncpa %s231, 1
    %233 = vsyncpa [#allocation4], 1
    %s234 = scalar_lea.sflag [#allocation4], 1
    %235 = vsyncpa %s234, 1
    %236 = vsyncpa [#allocation5], 1
    %s237 = scalar_lea.sflag [#allocation5], 1
    %238 = vsyncpa %s237, 1

</llo_original>
